<compile_context>
chip_gen: v7x
topology: tpu7x:2x2x1
jax: 0.10.0
libtpu: 0.0.40
codegen_flags: <defaults>
</compile_context>

<pallas_src>
import functools

import jax
import jax.numpy as jnp
from jax import lax
from jax.experimental import pallas as pl
from jax.experimental.pallas import tpu as pltpu

FX_ONE_LOG2 = 10
FX_ONE = 1 << FX_ONE_LOG2  # 1024


def _sdiv_pow2(a, k, r):
    """fx_div(a, 2**k) with stochastic rounding.

    Arithmetic shift right == floor division; a & (2^k - 1) is the non-negative
    modulo; r is a uniform integer in [0, 2^k) (exactly torch's randint % 2^k)."""
    return (a >> k) + (r < (a & ((1 << k) - 1))).astype(jnp.int32)


def _softmax_fx_kernel(x_ref, r0_ref, r1_ref, r2_ref, o_ref, *, groups, channels):
    G, C = groups, channels
    x = x_ref[...]            # (G*C, T) int32 fixed point
    r0 = r0_ref[...]
    r1 = r1_ref[...]
    r2 = r2_ref[...]

    # ---- channel max (segmented over sublane groups when images are packed) ----
    if G == 1:
        mx = jnp.max(x, axis=0, keepdims=True)                        # (1, T)
    else:
        shift = C.bit_length() - 1                                    # C is a power of 2 here
        gid = lax.broadcasted_iota(jnp.int32, x.shape, 0) >> shift    # group id per sublane
        int_min = jnp.asarray(jnp.iinfo(jnp.int32).min, dtype=jnp.int32)
        mx = jnp.zeros_like(x)
        for g in range(G):
            in_g = gid == g
            mg = jnp.max(jnp.where(in_g, x, int_min), axis=0, keepdims=True)
            mx = jnp.where(in_g, mg, mx)
    x = x - mx                                                        # x <= 0

    # ---- fx_exp: x = fx_one + fx_div(x, 64); then 6x fx_sq(x)=fx_div(x*x, fx_one) ----
    x = FX_ONE + _sdiv_pow2(x, 6, r0 & 63)
    x = _sdiv_pow2(x * x, FX_ONE_LOG2, (r0 >> 6) & 1023)
    x = _sdiv_pow2(x * x, FX_ONE_LOG2, (r0 >> 16) & 1023)
    x = _sdiv_pow2(x * x, FX_ONE_LOG2, r1 & 1023)
    x = _sdiv_pow2(x * x, FX_ONE_LOG2, (r1 >> 10) & 1023)
    x = _sdiv_pow2(x * x, FX_ONE_LOG2, (r1 >> 20) & 1023)
    x = _sdiv_pow2(x * x, FX_ONE_LOG2, r2 & 1023)

    # ---- denominator: channel sum (segmented when packed); kept un-broadcast for G==1 ----
    if G == 1:
        b = jnp.sum(x, axis=0, keepdims=True)                         # (1, T), broadcasts below
    else:
        b = jnp.zeros_like(x)
        for g in range(G):
            in_g = gid == g
            sg = jnp.sum(jnp.where(in_g, x, 0), axis=0, keepdims=True)
            b = jnp.where(in_g, sg, b)

    # ---- out = fx_div(x * fx_one, b) ----
    a_i = x * FX_ONE                                                  # <= 2^20: exact in f32
    inv_b = 1.0 / b.astype(jnp.float32)                               # hoisted reciprocal
    q = jnp.floor(a_i.astype(jnp.float32) * inv_b).astype(jnp.int32)
    m = a_i - q * b
    # one-step correction -> exact floor / mod (f32 quotient error << 1)
    neg = m < 0
    q = jnp.where(neg, q - 1, q)
    m = jnp.where(neg, m + b, m)
    big = m >= b
    q = jnp.where(big, q + 1, q)
    m = jnp.where(big, m - b, m)

    # Stochastic round-up with probability m / b.  torch draws randint(0, 2^31) % b;
    # a 20-bit uniform compared against m/b has bias O(2^-20), same order as
    # torch's own modulo bias, since b << 2^20 for sane channel counts.
    u = ((r2 >> 10) & ((1 << 20) - 1)).astype(jnp.float32)
    frac = m.astype(jnp.float32) * inv_b                              # in [0, 1)
    round_up = u * jnp.float32(1.0 / (1 << 20)) < frac
    o_ref[...] = q + round_up.astype(jnp.int32)


def _lane_tile(gc, hw):
    """Lane-tile size: multiple of 128, bounded by a conservative VMEM budget
    (~25 int32 planes of (gc, T) live per step incl. double-buffered I/O)."""
    hw128 = ((hw + 127) // 128) * 128
    budget = 8 * 1024 * 1024
    t = (budget // (100 * gc)) // 128 * 128
    return int(max(128, min(hw128, t, 8192)))


def softmax_fx(x, seed=0):
    """Fixed-point softmax over axis=1 of an NCHW int32 tensor (zeronn semantics)."""
    assert x.dtype == jnp.int32
    N, C, H, W = x.shape
    HW = H * W
    # exact f32 floor-division relies on b = sum_c(x_c) < 2^24 (x_c <= fx_one)
    assert C * (FX_ONE + 1) < (1 << 24), "too many channels for the f32 division trick"

    # Pack several images along the sublane axis when C < 8 (fills 8-sublane vregs).
    G = 8 // C if (C < 8 and 8 % C == 0) else 1
    while G > 1 and N % G != 0:
        G //= 2
    NB, GC = N // G, G * C

    T = _lane_tile(GC, HW)                      # lane tile (multiple of 128)
    HW_pad = pl.cdiv(HW, T) * T                 # lane-dense, divisible by T

    x3 = x.reshape(N, C, HW)
    if HW_pad != HW:
        x3 = jnp.pad(x3, ((0, 0), (0, 0), (0, HW_pad - HW)))
    x3 = x3.reshape(NB, GC, HW_pad)

    # Host-side randomness (3 x 32-bit words per element, bit-sliced in-kernel).
    rbits = jax.random.bits(jax.random.PRNGKey(seed), (3, NB, GC, HW_pad), dtype=jnp.uint32)
    r0, r1, r2 = (lax.bitcast_convert_type(rbits[i], jnp.int32) for i in range(3))

    kernel = functools.partial(_softmax_fx_kernel, groups=G, channels=C)
    spec = pl.BlockSpec((None, GC, T), lambda i, j: (i, 0, j))

    out = pl.pallas_call(
        kernel,
        out_shape=jax.ShapeDtypeStruct((NB, GC, HW_pad), jnp.int32),
        grid=(NB, HW_pad // T),
        in_specs=[spec, spec, spec, spec],
        out_specs=spec,
        compiler_params=pltpu.CompilerParams(
            dimension_semantics=("parallel", "parallel"),
            vmem_limit_bytes=32 * 1024 * 1024,
        ),
    )(x3, r0, r1, r2)

    return out.reshape(N, C, HW_pad)[:, :, :HW].reshape(N, C, H, W)


if __name__ == "__main__":
    key = jax.random.PRNGKey(0)
    N, C, H, W = 2, 4, 16, 16
    # fx_from_fp: float -> int32 fixed point (scale by fx_one)
    x_fp = jax.random.normal(key, (N, C, H, W), dtype=jnp.float32)
    x = (x_fp * FX_ONE).astype(jnp.int32)

    out = jax.block_until_ready(softmax_fx(x, seed=0))

    assert out.shape == (N, C, H, W)
    assert out.dtype == jnp.int32
    # Fixed-point softmax: per-pixel channel sums equal fx_one up to +/- C units
    # of (stochastic) rounding noise.
    sums = jnp.sum(out, axis=1)
    assert bool(jnp.all(jnp.abs(sums - FX_ONE) <= C)), "fixed-point softmax sums off"
    # Outputs are valid fixed-point probabilities.
    assert bool(jnp.all(out >= 0)) and bool(jnp.all(out <= FX_ONE))

    print("KERNEL_OK")
</pallas_src>

<mosaic_0001>
module attributes {stable_mosaic.version = 11 : i64} {
  func.func @_softmax_fx_kernel(%arg0: i32, %arg1: i32, %arg2: memref<1x8x256xi32, #tpu.memory_space<vmem>>, %arg3: memref<1x8x256xi32, #tpu.memory_space<vmem>>, %arg4: memref<1x8x256xi32, #tpu.memory_space<vmem>>, %arg5: memref<1x8x256xi32, #tpu.memory_space<vmem>>, %arg6: memref<1x8x256xi32, #tpu.memory_space<vmem>>) attributes {dimension_semantics = [#tpu.dimension_semantics<parallel>, #tpu.dimension_semantics<parallel>], iteration_bounds = array<i64: 1, 1>, scalar_prefetch = 0 : i64, scratch_operands = 0 : i64, tpu.core_type = #tpu.core_type<tc>, window_params = [{transform_indices = @transform_0, window_bounds = array<i64: 1, 8, 256>}, {transform_indices = @transform_1, window_bounds = array<i64: 1, 8, 256>}, {transform_indices = @transform_2, window_bounds = array<i64: 1, 8, 256>}, {transform_indices = @transform_3, window_bounds = array<i64: 1, 8, 256>}, {transform_indices = @transform_4, window_bounds = array<i64: 1, 8, 256>}]} {
    %c0 = arith.constant 0 : index
    %c0_0 = arith.constant 0 : index
    %c0_1 = arith.constant 0 : index
    %0 = vector.load %arg2[%c0, %c0_0, %c0_1] : memref<1x8x256xi32, #tpu.memory_space<vmem>>, vector<1x8x256xi32>
    %1 = vector.shape_cast %0 : vector<1x8x256xi32> to vector<8x256xi32>
    %c0_2 = arith.constant 0 : index
    %c0_3 = arith.constant 0 : index
    %c0_4 = arith.constant 0 : index
    %2 = vector.load %arg3[%c0_2, %c0_3, %c0_4] : memref<1x8x256xi32, #tpu.memory_space<vmem>>, vector<1x8x256xi32>
    %3 = vector.shape_cast %2 : vector<1x8x256xi32> to vector<8x256xi32>
    %c0_5 = arith.constant 0 : index
    %c0_6 = arith.constant 0 : index
    %c0_7 = arith.constant 0 : index
    %4 = vector.load %arg4[%c0_5, %c0_6, %c0_7] : memref<1x8x256xi32, #tpu.memory_space<vmem>>, vector<1x8x256xi32>
    %5 = vector.shape_cast %4 : vector<1x8x256xi32> to vector<8x256xi32>
    %c0_8 = arith.constant 0 : index
    %c0_9 = arith.constant 0 : index
    %c0_10 = arith.constant 0 : index
    %6 = vector.load %arg5[%c0_8, %c0_9, %c0_10] : memref<1x8x256xi32, #tpu.memory_space<vmem>>, vector<1x8x256xi32>
    %7 = vector.shape_cast %6 : vector<1x8x256xi32> to vector<8x256xi32>
    %8 = tpu.iota {dimensions = array<i32: 0>} : vector<8x256xi32>
    %c2_i32 = arith.constant 2 : i32
    %9 = vector.broadcast %c2_i32 : i32 to vector<8x256xi32>
    %10 = arith.shrsi %8, %9 : vector<8x256xi32>
    %c0_i32 = arith.constant 0 : i32
    %11 = vector.broadcast %c0_i32 : i32 to vector<8x256xi32>
    %c0_i32_11 = arith.constant 0 : i32
    %12 = vector.broadcast %c0_i32_11 : i32 to vector<8x256xi32>
    %13 = arith.cmpi eq, %10, %12 : vector<8x256xi32>
    %c-2147483648_i32 = arith.constant -2147483648 : i32
    %14 = vector.broadcast %c-2147483648_i32 : i32 to vector<8x256xi32>
    %15 = arith.select %13, %1, %14 : vector<8x256xi1>, vector<8x256xi32>
    %cst = arith.constant dense<-2147483648> : vector<256xi32>
    %16 = vector.multi_reduction <maxsi>, %15, %cst [0] : vector<8x256xi32> to vector<256xi32>
    %17 = vector.shape_cast %16 : vector<256xi32> to vector<1x256xi32>
    %18 = vector.shape_cast %17 : vector<1x256xi32> to vector<1x256xi32>
    %19 = vector.broadcast %18 : vector<1x256xi32> to vector<8x256xi32>
    %20 = arith.select %13, %19, %11 : vector<8x256xi1>, vector<8x256xi32>
    %c1_i32 = arith.constant 1 : i32
    %21 = vector.broadcast %c1_i32 : i32 to vector<8x256xi32>
    %22 = arith.cmpi eq, %10, %21 : vector<8x256xi32>
    %c-2147483648_i32_12 = arith.constant -2147483648 : i32
    %23 = vector.broadcast %c-2147483648_i32_12 : i32 to vector<8x256xi32>
    %24 = arith.select %22, %1, %23 : vector<8x256xi1>, vector<8x256xi32>
    %cst_13 = arith.constant dense<-2147483648> : vector<256xi32>
    %25 = vector.multi_reduction <maxsi>, %24, %cst_13 [0] : vector<8x256xi32> to vector<256xi32>
    %26 = vector.shape_cast %25 : vector<256xi32> to vector<1x256xi32>
    %27 = vector.shape_cast %26 : vector<1x256xi32> to vector<1x256xi32>
    %28 = vector.broadcast %27 : vector<1x256xi32> to vector<8x256xi32>
    %29 = arith.select %22, %28, %20 : vector<8x256xi1>, vector<8x256xi32>
    %30 = arith.subi %1, %29 : vector<8x256xi32>
    %c63_i32 = arith.constant 63 : i32
    %31 = vector.broadcast %c63_i32 : i32 to vector<8x256xi32>
    %32 = arith.andi %3, %31 : vector<8x256xi32>
    %c6_i32 = arith.constant 6 : i32
    %33 = vector.broadcast %c6_i32 : i32 to vector<8x256xi32>
    %34 = arith.shrsi %30, %33 : vector<8x256xi32>
    %c63_i32_14 = arith.constant 63 : i32
    %35 = vector.broadcast %c63_i32_14 : i32 to vector<8x256xi32>
    %36 = arith.andi %30, %35 : vector<8x256xi32>
    %37 = arith.cmpi slt, %32, %36 : vector<8x256xi32>
    %38 = arith.extui %37 : vector<8x256xi1> to vector<8x256xi32>
    %39 = arith.addi %34, %38 : vector<8x256xi32>
    %c1024_i32 = arith.constant 1024 : i32
    %40 = vector.broadcast %c1024_i32 : i32 to vector<8x256xi32>
    %41 = arith.addi %40, %39 : vector<8x256xi32>
    %42 = arith.muli %41, %41 : vector<8x256xi32>
    %c6_i32_15 = arith.constant 6 : i32
    %43 = vector.broadcast %c6_i32_15 : i32 to vector<8x256xi32>
    %44 = arith.shrsi %3, %43 : vector<8x256xi32>
    %c1023_i32 = arith.constant 1023 : i32
    %45 = vector.broadcast %c1023_i32 : i32 to vector<8x256xi32>
    %46 = arith.andi %44, %45 : vector<8x256xi32>
    %c10_i32 = arith.constant 10 : i32
    %47 = vector.broadcast %c10_i32 : i32 to vector<8x256xi32>
    %48 = arith.shrsi %42, %47 : vector<8x256xi32>
    %c1023_i32_16 = arith.constant 1023 : i32
    %49 = vector.broadcast %c1023_i32_16 : i32 to vector<8x256xi32>
    %50 = arith.andi %42, %49 : vector<8x256xi32>
    %51 = arith.cmpi slt, %46, %50 : vector<8x256xi32>
    %52 = arith.extui %51 : vector<8x256xi1> to vector<8x256xi32>
    %53 = arith.addi %48, %52 : vector<8x256xi32>
    %54 = arith.muli %53, %53 : vector<8x256xi32>
    %c16_i32 = arith.constant 16 : i32
    %55 = vector.broadcast %c16_i32 : i32 to vector<8x256xi32>
    %56 = arith.shrsi %3, %55 : vector<8x256xi32>
    %c1023_i32_17 = arith.constant 1023 : i32
    %57 = vector.broadcast %c1023_i32_17 : i32 to vector<8x256xi32>
    %58 = arith.andi %56, %57 : vector<8x256xi32>
    %c10_i32_18 = arith.constant 10 : i32
    %59 = vector.broadcast %c10_i32_18 : i32 to vector<8x256xi32>
    %60 = arith.shrsi %54, %59 : vector<8x256xi32>
    %c1023_i32_19 = arith.constant 1023 : i32
    %61 = vector.broadcast %c1023_i32_19 : i32 to vector<8x256xi32>
    %62 = arith.andi %54, %61 : vector<8x256xi32>
    %63 = arith.cmpi slt, %58, %62 : vector<8x256xi32>
    %64 = arith.extui %63 : vector<8x256xi1> to vector<8x256xi32>
    %65 = arith.addi %60, %64 : vector<8x256xi32>
    %66 = arith.muli %65, %65 : vector<8x256xi32>
    %c1023_i32_20 = arith.constant 1023 : i32
    %67 = vector.broadcast %c1023_i32_20 : i32 to vector<8x256xi32>
    %68 = arith.andi %5, %67 : vector<8x256xi32>
    %c10_i32_21 = arith.constant 10 : i32
    %69 = vector.broadcast %c10_i32_21 : i32 to vector<8x256xi32>
    %70 = arith.shrsi %66, %69 : vector<8x256xi32>
    %c1023_i32_22 = arith.constant 1023 : i32
    %71 = vector.broadcast %c1023_i32_22 : i32 to vector<8x256xi32>
    %72 = arith.andi %66, %71 : vector<8x256xi32>
    %73 = arith.cmpi slt, %68, %72 : vector<8x256xi32>
    %74 = arith.extui %73 : vector<8x256xi1> to vector<8x256xi32>
    %75 = arith.addi %70, %74 : vector<8x256xi32>
    %76 = arith.muli %75, %75 : vector<8x256xi32>
    %c10_i32_23 = arith.constant 10 : i32
    %77 = vector.broadcast %c10_i32_23 : i32 to vector<8x256xi32>
    %78 = arith.shrsi %5, %77 : vector<8x256xi32>
    %c1023_i32_24 = arith.constant 1023 : i32
    %79 = vector.broadcast %c1023_i32_24 : i32 to vector<8x256xi32>
    %80 = arith.andi %78, %79 : vector<8x256xi32>
    %c10_i32_25 = arith.constant 10 : i32
    %81 = vector.broadcast %c10_i32_25 : i32 to vector<8x256xi32>
    %82 = arith.shrsi %76, %81 : vector<8x256xi32>
    %c1023_i32_26 = arith.constant 1023 : i32
    %83 = vector.broadcast %c1023_i32_26 : i32 to vector<8x256xi32>
    %84 = arith.andi %76, %83 : vector<8x256xi32>
    %85 = arith.cmpi slt, %80, %84 : vector<8x256xi32>
    %86 = arith.extui %85 : vector<8x256xi1> to vector<8x256xi32>
    %87 = arith.addi %82, %86 : vector<8x256xi32>
    %88 = arith.muli %87, %87 : vector<8x256xi32>
    %c20_i32 = arith.constant 20 : i32
    %89 = vector.broadcast %c20_i32 : i32 to vector<8x256xi32>
    %90 = arith.shrsi %5, %89 : vector<8x256xi32>
    %c1023_i32_27 = arith.constant 1023 : i32
    %91 = vector.broadcast %c1023_i32_27 : i32 to vector<8x256xi32>
    %92 = arith.andi %90, %91 : vector<8x256xi32>
    %c10_i32_28 = arith.constant 10 : i32
    %93 = vector.broadcast %c10_i32_28 : i32 to vector<8x256xi32>
    %94 = arith.shrsi %88, %93 : vector<8x256xi32>
    %c1023_i32_29 = arith.constant 1023 : i32
    %95 = vector.broadcast %c1023_i32_29 : i32 to vector<8x256xi32>
    %96 = arith.andi %88, %95 : vector<8x256xi32>
    %97 = arith.cmpi slt, %92, %96 : vector<8x256xi32>
    %98 = arith.extui %97 : vector<8x256xi1> to vector<8x256xi32>
    %99 = arith.addi %94, %98 : vector<8x256xi32>
    %100 = arith.muli %99, %99 : vector<8x256xi32>
    %c1023_i32_30 = arith.constant 1023 : i32
    %101 = vector.broadcast %c1023_i32_30 : i32 to vector<8x256xi32>
    %102 = arith.andi %7, %101 : vector<8x256xi32>
    %c10_i32_31 = arith.constant 10 : i32
    %103 = vector.broadcast %c10_i32_31 : i32 to vector<8x256xi32>
    %104 = arith.shrsi %100, %103 : vector<8x256xi32>
    %c1023_i32_32 = arith.constant 1023 : i32
    %105 = vector.broadcast %c1023_i32_32 : i32 to vector<8x256xi32>
    %106 = arith.andi %100, %105 : vector<8x256xi32>
    %107 = arith.cmpi slt, %102, %106 : vector<8x256xi32>
    %108 = arith.extui %107 : vector<8x256xi1> to vector<8x256xi32>
    %109 = arith.addi %104, %108 : vector<8x256xi32>
    %c0_i32_33 = arith.constant 0 : i32
    %110 = vector.broadcast %c0_i32_33 : i32 to vector<8x256xi32>
    %c0_i32_34 = arith.constant 0 : i32
    %111 = vector.broadcast %c0_i32_34 : i32 to vector<8x256xi32>
    %112 = arith.cmpi eq, %10, %111 : vector<8x256xi32>
    %c0_i32_35 = arith.constant 0 : i32
    %113 = vector.broadcast %c0_i32_35 : i32 to vector<8x256xi32>
    %114 = arith.select %112, %109, %113 : vector<8x256xi1>, vector<8x256xi32>
    %cst_36 = arith.constant dense<0> : vector<256xi32>
    %115 = vector.multi_reduction <add>, %114, %cst_36 [0] : vector<8x256xi32> to vector<256xi32>
    %116 = vector.shape_cast %115 : vector<256xi32> to vector<1x256xi32>
    %117 = vector.shape_cast %116 : vector<1x256xi32> to vector<1x256xi32>
    %118 = vector.broadcast %117 : vector<1x256xi32> to vector<8x256xi32>
    %119 = arith.select %112, %118, %110 : vector<8x256xi1>, vector<8x256xi32>
    %c1_i32_37 = arith.constant 1 : i32
    %120 = vector.broadcast %c1_i32_37 : i32 to vector<8x256xi32>
    %121 = arith.cmpi eq, %10, %120 : vector<8x256xi32>
    %c0_i32_38 = arith.constant 0 : i32
    %122 = vector.broadcast %c0_i32_38 : i32 to vector<8x256xi32>
    %123 = arith.select %121, %109, %122 : vector<8x256xi1>, vector<8x256xi32>
    %cst_39 = arith.constant dense<0> : vector<256xi32>
    %124 = vector.multi_reduction <add>, %123, %cst_39 [0] : vector<8x256xi32> to vector<256xi32>
    %125 = vector.shape_cast %124 : vector<256xi32> to vector<1x256xi32>
    %126 = vector.shape_cast %125 : vector<1x256xi32> to vector<1x256xi32>
    %127 = vector.broadcast %126 : vector<1x256xi32> to vector<8x256xi32>
    %128 = arith.select %121, %127, %119 : vector<8x256xi1>, vector<8x256xi32>
    %c1024_i32_40 = arith.constant 1024 : i32
    %129 = vector.broadcast %c1024_i32_40 : i32 to vector<8x256xi32>
    %130 = arith.muli %109, %129 : vector<8x256xi32>
    %131 = arith.sitofp %128 : vector<8x256xi32> to vector<8x256xf32>
    %cst_41 = arith.constant 1.000000e+00 : f32
    %132 = vector.broadcast %cst_41 : f32 to vector<8x256xf32>
    %133 = arith.divf %132, %131 : vector<8x256xf32>
    %134 = arith.sitofp %130 : vector<8x256xi32> to vector<8x256xf32>
    %135 = arith.mulf %134, %133 : vector<8x256xf32>
    %136 = math.floor %135 : vector<8x256xf32>
    %137 = arith.fptosi %136 : vector<8x256xf32> to vector<8x256xi32>
    %138 = arith.muli %137, %128 : vector<8x256xi32>
    %139 = arith.subi %130, %138 : vector<8x256xi32>
    %c0_i32_42 = arith.constant 0 : i32
    %140 = vector.broadcast %c0_i32_42 : i32 to vector<8x256xi32>
    %141 = arith.cmpi slt, %139, %140 : vector<8x256xi32>
    %c1_i32_43 = arith.constant 1 : i32
    %142 = vector.broadcast %c1_i32_43 : i32 to vector<8x256xi32>
    %143 = arith.subi %137, %142 : vector<8x256xi32>
    %144 = arith.select %141, %143, %137 : vector<8x256xi1>, vector<8x256xi32>
    %145 = arith.addi %139, %128 : vector<8x256xi32>
    %146 = arith.select %141, %145, %139 : vector<8x256xi1>, vector<8x256xi32>
    %147 = arith.cmpi sge, %146, %128 : vector<8x256xi32>
    %c1_i32_44 = arith.constant 1 : i32
    %148 = vector.broadcast %c1_i32_44 : i32 to vector<8x256xi32>
    %149 = arith.addi %144, %148 : vector<8x256xi32>
    %150 = arith.select %147, %149, %144 : vector<8x256xi1>, vector<8x256xi32>
    %151 = arith.subi %146, %128 : vector<8x256xi32>
    %152 = arith.select %147, %151, %146 : vector<8x256xi1>, vector<8x256xi32>
    %c10_i32_45 = arith.constant 10 : i32
    %153 = vector.broadcast %c10_i32_45 : i32 to vector<8x256xi32>
    %154 = arith.shrsi %7, %153 : vector<8x256xi32>
    %c1048575_i32 = arith.constant 1048575 : i32
    %155 = vector.broadcast %c1048575_i32 : i32 to vector<8x256xi32>
    %156 = arith.andi %154, %155 : vector<8x256xi32>
    %157 = arith.sitofp %156 : vector<8x256xi32> to vector<8x256xf32>
    %158 = arith.sitofp %152 : vector<8x256xi32> to vector<8x256xf32>
    %159 = arith.mulf %158, %133 : vector<8x256xf32>
    %cst_46 = arith.constant 9.53674316E-7 : f32
    %160 = vector.broadcast %cst_46 : f32 to vector<8x256xf32>
    %161 = arith.mulf %157, %160 : vector<8x256xf32>
    %162 = arith.cmpf olt, %161, %159 : vector<8x256xf32>
    %163 = arith.extui %162 : vector<8x256xi1> to vector<8x256xi32>
    %164 = arith.addi %150, %163 : vector<8x256xi32>
    %c0_47 = arith.constant 0 : index
    %c0_48 = arith.constant 0 : index
    %c0_49 = arith.constant 0 : index
    %165 = vector.load %arg6[%c0_47, %c0_48, %c0_49] : memref<1x8x256xi32, #tpu.memory_space<vmem>>, vector<1x8x256xi32>
    %166 = vector.shape_cast %165 : vector<1x8x256xi32> to vector<8x256xi32>
    %167 = vector.shape_cast %164 : vector<8x256xi32> to vector<1x8x256xi32>
    tpu.vector_store %arg6[%c0_47, %c0_48, %c0_49], %167 {strides = array<i32>} : memref<1x8x256xi32, #tpu.memory_space<vmem>>, vector<1x8x256xi32>,
    return
  }
  func.func @transform_0(%arg0: i32, %arg1: i32) -> (i32, i32, i32) {
    %c0_i32 = arith.constant 0 : i32
    %c0_i32_0 = arith.constant 0 : i32
    return %arg0, %c0_i32, %arg1 : i32, i32, i32
  }
  func.func @transform_1(%arg0: i32, %arg1: i32) -> (i32, i32, i32) {
    %c0_i32 = arith.constant 0 : i32
    %c0_i32_0 = arith.constant 0 : i32
    return %arg0, %c0_i32, %arg1 : i32, i32, i32
  }
  func.func @transform_2(%arg0: i32, %arg1: i32) -> (i32, i32, i32) {
    %c0_i32 = arith.constant 0 : i32
    %c0_i32_0 = arith.constant 0 : i32
    return %arg0, %c0_i32, %arg1 : i32, i32, i32
  }
  func.func @transform_3(%arg0: i32, %arg1: i32) -> (i32, i32, i32) {
    %c0_i32 = arith.constant 0 : i32
    %c0_i32_0 = arith.constant 0 : i32
    return %arg0, %c0_i32, %arg1 : i32, i32, i32
  }
  func.func @transform_4(%arg0: i32, %arg1: i32) -> (i32, i32, i32) {
    %c0_i32 = arith.constant 0 : i32
    %c0_i32_0 = arith.constant 0 : i32
    return %arg0, %c0_i32, %arg1 : i32, i32, i32
  }
}

</mosaic_0001>

<llo_original>
// kernel: tpu_custom_call.1
$region0: #{tpu_custom_call.1}
  #allocation0 [shape = 'u32[]', space=smem, size = 0x4, offset = 0x4, fixed_abs, tag = 'smem constant byte address 0x4 - core index']
  #allocation1 [shape = 'u32[144,128]{1,0:T(1,128)}', space=vmem, size = 0x12000, scoped, tag = 'internal scratch']
  %s0 = inlined_call_operand.hbm [shape: s32[1,8,256], index: 0, kind: input, shape index: {}]
  %s1 = inlined_call_operand.hbm [shape: s32[1,8,256], index: 1, kind: input, shape index: {}]
  %s2 = inlined_call_operand.hbm [shape: s32[1,8,256], index: 2, kind: input, shape index: {}]
  %s3 = inlined_call_operand.hbm [shape: s32[1,8,256], index: 3, kind: input, shape index: {}]
  %s4 = inlined_call_operand.hbm [shape: s32[1,8,256], index: 4, kind: output, shape index: {}]
  %s5 = sld [smem:[#allocation0]]
  $region42: #{tpu_custom_call.1} parent=0
    _
  %s7 = ssub.s32 1, %s5
  %s8 = scalar_select 0, %s7, %s5
  $region1: #{tpu_custom_call.1} parent=0
    #allocation2 [shape = 'u8[8192]{0}', space=vmem, size = 0x2000, scoped, tag = 'input window, operand 0, single buffered']
    #allocation3 [shape = 's32[1]{0}', space=sflag, size = 0x4, scoped, tag = 'scoped memory for tpu_custom_call.1']
    #allocation4 [shape = 's32[1]{0}', space=sflag, size = 0x4, scoped, tag = 'scoped memory for tpu_custom_call.1']
    #allocation5 [shape = 'u8[8192]{0}', space=vmem, size = 0x2000, scoped, tag = 'input window, operand 1, single buffered']
    #allocation6 [shape = 's32[1]{0}', space=sflag, size = 0x4, scoped, tag = 'scoped memory for tpu_custom_call.1']
    #allocation7 [shape = 'u8[8192]{0}', space=vmem, size = 0x2000, scoped, tag = 'input window, operand 2, single buffered']
    #allocation8 [shape = 'u8[8192]{0}', space=vmem, size = 0x2000, scoped, tag = 'input window, operand 3, single buffered']
    #allocation9 [shape = 's32[1]{0}', space=sflag, size = 0x4, scoped, tag = 'scoped memory for tpu_custom_call.1']
    #allocation10 [shape = 'u8[8192]{0}', space=vmem, size = 0x2000, scoped, tag = 'output window, operand 0, single buffered']
    %9 = vsyncpa [#allocation3], 0
    %10 = vsyncpa [#allocation6], 0
    %11 = vsyncpa [#allocation9], 0
    %12 = vsyncpa [#allocation4], 0
    // Predicated region
    $region2: #{tpu_custom_call.1} parent=1 // pred_check
      _
    $region3: #{tpu_custom_call.1} parent=1 // pred_check_branch
      %14 = sbr.rel (0) target = $region5
    $region4: #{tpu_custom_call.1} parent=1 // pred_region
      %s16 = ssub.s32 256, 256
      %17 = vsyncadd [#allocation3], %s16
      %s19 = sshll.u32 [#allocation2], 4
      %s20 = int_to_ptr.vmem [resolvable:$true] %s19
      %22 = dma.hbm_to_vmem [thread:$0]  %s0, 256, %s20, [#allocation3]
    $region5: #{tpu_custom_call.1} parent=1 // pred_fallthru
      _
    // Predicated region
    $region6: #{tpu_custom_call.1} parent=1 // pred_check
      _
    $region7: #{tpu_custom_call.1} parent=1 // pred_check_branch
      %24 = sbr.rel (0) target = $region9
    $region8: #{tpu_custom_call.1} parent=1 // pred_region
      %s26 = ssub.s32 256, 256
      %27 = vsyncadd [#allocation6], %s26
      %s29 = sshll.u32 [#allocation5], 4
      %s30 = int_to_ptr.vmem [resolvable:$true] %s29
      %32 = dma.hbm_to_vmem [thread:$0]  %s1, 256, %s30, [#allocation6]
    $region9: #{tpu_custom_call.1} parent=1 // pred_fallthru
      _
    // Predicated region
    $region10: #{tpu_custom_call.1} parent=1 // pred_check
      _
    $region11: #{tpu_custom_call.1} parent=1 // pred_check_branch
      %34 = sbr.rel (0) target = $region13
    $region12: #{tpu_custom_call.1} parent=1 // pred_region
      %s36 = ssub.s32 256, 256
      %37 = vsyncadd [#allocation6], %s36
      %s39 = sshll.u32 [#allocation7], 4
      %s40 = int_to_ptr.vmem [resolvable:$true] %s39
      %42 = dma.hbm_to_vmem [thread:$0]  %s2, 256, %s40, [#allocation6]
    $region13: #{tpu_custom_call.1} parent=1 // pred_fallthru
      _
    // Predicated region
    $region14: #{tpu_custom_call.1} parent=1 // pred_check
      _
    $region15: #{tpu_custom_call.1} parent=1 // pred_check_branch
      %44 = sbr.rel (0) target = $region17
    $region16: #{tpu_custom_call.1} parent=1 // pred_region
      %s46 = ssub.s32 256, 256
      %47 = vsyncadd [#allocation9], %s46
      %s49 = sshll.u32 [#allocation8], 4
      %s50 = int_to_ptr.vmem [resolvable:$true] %s49
      %52 = dma.hbm_to_vmem [thread:$0]  %s3, 256, %s50, [#allocation9]
    $region17: #{tpu_custom_call.1} parent=1 // pred_fallthru
      _
    // Predicated region
    $region18: #{tpu_custom_call.1} parent=1 // pred_check
      _
    $region19: #{tpu_custom_call.1} parent=1 // pred_check_branch
      %54 = sbr.rel (0) target = $region21
    $region20: #{tpu_custom_call.1} parent=1 // pred_region
      %55 = dma.done [#allocation3], 256
    $region21: #{tpu_custom_call.1} parent=1 // pred_fallthru
      _
    // Predicated region
    $region22: #{tpu_custom_call.1} parent=1 // pred_check
      _
    $region23: #{tpu_custom_call.1} parent=1 // pred_check_branch
      %57 = sbr.rel (0) target = $region25
    $region24: #{tpu_custom_call.1} parent=1 // pred_region
      %58 = dma.done [#allocation6], 256
    $region25: #{tpu_custom_call.1} parent=1 // pred_fallthru
      _
    // Predicated region
    $region26: #{tpu_custom_call.1} parent=1 // pred_check
      _
    $region27: #{tpu_custom_call.1} parent=1 // pred_check_branch
      %60 = sbr.rel (0) target = $region29
    $region28: #{tpu_custom_call.1} parent=1 // pred_region
      %61 = dma.done [#allocation6], 256
    $region29: #{tpu_custom_call.1} parent=1 // pred_fallthru
      _
    // Predicated region
    $region30: #{tpu_custom_call.1} parent=1 // pred_check
      _
    $region31: #{tpu_custom_call.1} parent=1 // pred_check_branch
      %63 = sbr.rel (0) target = $region33
    $region32: #{tpu_custom_call.1} parent=1 // pred_region
      %64 = dma.done [#allocation9], 256
    $region33: #{tpu_custom_call.1} parent=1 // pred_fallthru
      _
    %v65 = vld [vmem:[#allocation2] sm:$0xff]
    %v66 = vld [vmem:[#allocation2 + $0x8] sm:$0xff]
    %v67 = vld [vmem:[#allocation5] sm:$0xff]
    %v68 = vld [vmem:[#allocation5 + $0x8] sm:$0xff]
    %v69 = vld [vmem:[#allocation7] sm:$0xff]
    %v70 = vld [vmem:[#allocation7 + $0x8] sm:$0xff]
    %v71 = vld [vmem:[#allocation8] sm:$0xff]
    %v72 = vld [vmem:[#allocation8 + $0x8] sm:$0xff]
    %v73 = vlaneseq
    %v74 = vshrl.u32 %v73, 7
    %v75 = vshra.s32 %v74, 2
    %vm76 = vcmp.eq.s32.totalorder %v75, 0
    %v77 = vsel %vm76, %v65, 2147483648
    %v78 = vsel %vm76, %v66, 2147483648
    %v79 = vrot.slane %v77, 4
    %vm80 = vcmp.gt.s32.totalorder %v77, %v79
    %v81 = vsel %vm80, %v77, %v79
    %v82 = vrot.slane %v81, 2
    %vm83 = vcmp.gt.s32.totalorder %v81, %v82
    %v84 = vsel %vm83, %v81, %v82
    %v85 = vrot.slane %v84, 1
    %vm86 = vcmp.gt.s32.totalorder %v84, %v85
    %v87 = vsel %vm86, %v84, %v85
    %v88 = vrot.slane %v78, 4
    %vm89 = vcmp.gt.s32.totalorder %v78, %v88
    %v90 = vsel %vm89, %v78, %v88
    %v91 = vrot.slane %v90, 2
    %vm92 = vcmp.gt.s32.totalorder %v90, %v91
    %v93 = vsel %vm92, %v90, %v91
    %v94 = vrot.slane %v93, 1
    %vm95 = vcmp.gt.s32.totalorder %v93, %v94
    %v96 = vsel %vm95, %v93, %v94
    %v97 = vsel %vm76, %v87, 0
    %v98 = vsel %vm76, %v96, 0
    %vm99 = vcmp.eq.s32.totalorder %v75, 1
    %v100 = vsel %vm99, %v65, 2147483648
    %v101 = vsel %vm99, %v66, 2147483648
    %v102 = vrot.slane %v100, 4
    %vm103 = vcmp.gt.s32.totalorder %v100, %v102
    %v104 = vsel %vm103, %v100, %v102
    %v105 = vrot.slane %v104, 2
    %vm106 = vcmp.gt.s32.totalorder %v104, %v105
    %v107 = vsel %vm106, %v104, %v105
    %v108 = vrot.slane %v107, 1
    %vm109 = vcmp.gt.s32.totalorder %v107, %v108
    %v110 = vsel %vm109, %v107, %v108
    %v111 = vrot.slane %v101, 4
    %vm112 = vcmp.gt.s32.totalorder %v101, %v111
    %v113 = vsel %vm112, %v101, %v111
    %v114 = vrot.slane %v113, 2
    %vm115 = vcmp.gt.s32.totalorder %v113, %v114
    %v116 = vsel %vm115, %v113, %v114
    %v117 = vrot.slane %v116, 1
    %vm118 = vcmp.gt.s32.totalorder %v116, %v117
    %v119 = vsel %vm118, %v116, %v117
    %v120 = vsel %vm99, %v110, %v97
    %v121 = vsel %vm99, %v119, %v98
    %v122 = vsub.s32 %v65, %v120
    %v123 = vsub.s32 %v66, %v121
    %v124 = vand.u32 %v67, 63
    %v125 = vand.u32 %v68, 63
    %v126 = vshra.s32 %v122, 6
    %v127 = vshra.s32 %v123, 6
    %v128 = vand.u32 %v122, 63
    %v129 = vand.u32 %v123, 63
    %vm130 = vcmp.lt.s32.totalorder %v124, %v128
    %vm131 = vcmp.lt.s32.totalorder %v125, %v129
    %v132 = vsel %vm130, 1, 0
    %v133 = vsel %vm131, 1, 0
    %v134 = vadd.s32 %v126, %v132
    %v135 = vadd.s32 %v127, %v133
    %v136 = vadd.s32 %v134, 1024
    %v137 = vadd.s32 %v135, 1024
    %v138 = vmul.u32 %v136, %v136
    %v139 = vmul.u32 %v137, %v137
    %v140 = vshra.s32 %v67, 6
    %v141 = vshra.s32 %v68, 6
    %v142 = vand.u32 %v140, 1023
    %v143 = vand.u32 %v141, 1023
    %v144 = vshra.s32 %v138, 10
    %v145 = vshra.s32 %v139, 10
    %v146 = vand.u32 %v138, 1023
    %v147 = vand.u32 %v139, 1023
    %vm148 = vcmp.lt.s32.totalorder %v142, %v146
    %vm149 = vcmp.lt.s32.totalorder %v143, %v147
    %v150 = vsel %vm148, 1, 0
    %v151 = vsel %vm149, 1, 0
    %v152 = vadd.s32 %v144, %v150
    %v153 = vadd.s32 %v145, %v151
    %v154 = vmul.u32 %v152, %v152
    %v155 = vmul.u32 %v153, %v153
    %v156 = vshra.s32 %v67, 16
    %v157 = vshra.s32 %v68, 16
    %v158 = vand.u32 %v156, 1023
    %v159 = vand.u32 %v157, 1023
    %v160 = vshra.s32 %v154, 10
    %v161 = vshra.s32 %v155, 10
    %v162 = vand.u32 %v154, 1023
    %v163 = vand.u32 %v155, 1023
    %vm164 = vcmp.lt.s32.totalorder %v158, %v162
    %vm165 = vcmp.lt.s32.totalorder %v159, %v163
    %v166 = vsel %vm164, 1, 0
    %v167 = vsel %vm165, 1, 0
    %v168 = vadd.s32 %v160, %v166
    %v169 = vadd.s32 %v161, %v167
    %v170 = vmul.u32 %v168, %v168
    %v171 = vmul.u32 %v169, %v169
    %v172 = vand.u32 %v69, 1023
    %v173 = vand.u32 %v70, 1023
    %v174 = vshra.s32 %v170, 10
    %v175 = vshra.s32 %v171, 10
    %v176 = vand.u32 %v170, 1023
    %v177 = vand.u32 %v171, 1023
    %vm178 = vcmp.lt.s32.totalorder %v172, %v176
    %vm179 = vcmp.lt.s32.totalorder %v173, %v177
    %v180 = vsel %vm178, 1, 0
    %v181 = vsel %vm179, 1, 0
    %v182 = vadd.s32 %v174, %v180
    %v183 = vadd.s32 %v175, %v181
    %v184 = vmul.u32 %v182, %v182
    %v185 = vmul.u32 %v183, %v183
    %v186 = vshra.s32 %v69, 10
    %v187 = vshra.s32 %v70, 10
    %v188 = vand.u32 %v186, 1023
    %v189 = vand.u32 %v187, 1023
    %v190 = vshra.s32 %v184, 10
    %v191 = vshra.s32 %v185, 10
    %v192 = vand.u32 %v184, 1023
    %v193 = vand.u32 %v185, 1023
    %vm194 = vcmp.lt.s32.totalorder %v188, %v192
    %vm195 = vcmp.lt.s32.totalorder %v189, %v193
    %v196 = vsel %vm194, 1, 0
    %v197 = vsel %vm195, 1, 0
    %v198 = vadd.s32 %v190, %v196
    %v199 = vadd.s32 %v191, %v197
    %v200 = vmul.u32 %v198, %v198
    %v201 = vmul.u32 %v199, %v199
    %v202 = vshra.s32 %v69, 20
    %v203 = vshra.s32 %v70, 20
    %v204 = vand.u32 %v202, 1023
    %v205 = vand.u32 %v203, 1023
    %v206 = vshra.s32 %v200, 10
    %v207 = vshra.s32 %v201, 10
    %v208 = vand.u32 %v200, 1023
    %v209 = vand.u32 %v201, 1023
    %vm210 = vcmp.lt.s32.totalorder %v204, %v208
    %vm211 = vcmp.lt.s32.totalorder %v205, %v209
    %v212 = vsel %vm210, 1, 0
    %v213 = vsel %vm211, 1, 0
    %v214 = vadd.s32 %v206, %v212
    %v215 = vadd.s32 %v207, %v213
    %v216 = vmul.u32 %v214, %v214
    %v217 = vmul.u32 %v215, %v215
    %v218 = vand.u32 %v71, 1023
    %v219 = vand.u32 %v72, 1023
    %v220 = vshra.s32 %v216, 10
    %v221 = vshra.s32 %v217, 10
    %v222 = vand.u32 %v216, 1023
    %v223 = vand.u32 %v217, 1023
    %vm224 = vcmp.lt.s32.totalorder %v218, %v222
    %vm225 = vcmp.lt.s32.totalorder %v219, %v223
    %v226 = vsel %vm224, 1, 0
    %v227 = vsel %vm225, 1, 0
    %v228 = vadd.s32 %v220, %v226
    %v229 = vadd.s32 %v221, %v227
    %v230 = vsel %vm76, %v228, 0
    %v231 = vsel %vm76, %v229, 0
    %v232 = vrot.slane %v230, 4
    %v233 = vadd.s32 %v230, %v232
    %v234 = vrot.slane %v233, 2
    %v235 = vadd.s32 %v233, %v234
    %v236 = vrot.slane %v235, 1
    %v237 = vadd.s32 %v235, %v236
    %v238 = vrot.slane %v231, 4
    %v239 = vadd.s32 %v231, %v238
    %v240 = vrot.slane %v239, 2
    %v241 = vadd.s32 %v239, %v240
    %v242 = vrot.slane %v241, 1
    %v243 = vadd.s32 %v241, %v242
    %v244 = vsel %vm76, %v237, 0
    %v245 = vsel %vm76, %v243, 0
    %v246 = vsel %vm99, %v228, 0
    %v247 = vsel %vm99, %v229, 0
    %v248 = vrot.slane %v246, 4
    %v249 = vadd.s32 %v246, %v248
    %v250 = vrot.slane %v249, 2
    %v251 = vadd.s32 %v249, %v250
    %v252 = vrot.slane %v251, 1
    %v253 = vadd.s32 %v251, %v252
    %v254 = vrot.slane %v247, 4
    %v255 = vadd.s32 %v247, %v254
    %v256 = vrot.slane %v255, 2
    %v257 = vadd.s32 %v255, %v256
    %v258 = vrot.slane %v257, 1
    %v259 = vadd.s32 %v257, %v258
    %v260 = vsel %vm99, %v253, %v244
    %v261 = vsel %vm99, %v259, %v245
    %v262 = vmul.u32 %v228, 1024
    %v263 = vmul.u32 %v229, 1024
    %v264 = vcvt.s32.f32 %v260
    %v265 = vcvt.s32.f32 %v261
    %v266 = vrcp.pop %v264
    %v267 = vmul.f32 1.0, %v266
    %v268 = vrcp.pop %v265
    %v269 = vmul.f32 1.0, %v268
    %v270 = vcvt.s32.f32 %v262
    %v271 = vcvt.s32.f32 %v263
    %v272 = vmul.f32 %v270, %v267
    %v273 = vmul.f32 %v271, %v269
    %v274 = vfloor.f32 %v272
    %v275 = vfloor.f32 %v273
    %v276 = vcvt.f32.s32.to.zero.pseudo %v274
    %v277 = vcvt.f32.s32.to.zero.pseudo %v275
    %v278 = vmul.u32 %v276, %v260
    %v279 = vmul.u32 %v277, %v261
    %v280 = vsub.s32 %v262, %v278
    %v281 = vsub.s32 %v263, %v279
    %vm282 = vcmp.lt.s32.totalorder %v280, 0
    %vm283 = vcmp.lt.s32.totalorder %v281, 0
    %v284 = vsub.s32 %v276, 1
    %v285 = vsub.s32 %v277, 1
    %v286 = vsel %vm282, %v284, %v276
    %v287 = vsel %vm283, %v285, %v277
    %v288 = vadd.s32 %v280, %v260
    %v289 = vadd.s32 %v281, %v261
    %v290 = vsel %vm282, %v288, %v280
    %v291 = vsel %vm283, %v289, %v281
    %vm292 = vcmp.ge.s32.totalorder %v290, %v260
    %vm293 = vcmp.ge.s32.totalorder %v291, %v261
    %v294 = vadd.s32 %v286, 1
    %v295 = vadd.s32 %v287, 1
    %v296 = vsel %vm292, %v294, %v286
    %v297 = vsel %vm293, %v295, %v287
    %v298 = vsub.s32 %v290, %v260
    %v299 = vsub.s32 %v291, %v261
    %v300 = vsel %vm292, %v298, %v290
    %v301 = vsel %vm293, %v299, %v291
    %v302 = vshra.s32 %v71, 10
    %v303 = vshra.s32 %v72, 10
    %v304 = vand.u32 %v302, 1048575
    %v305 = vand.u32 %v303, 1048575
    %v306 = vcvt.s32.f32 %v304
    %v307 = vcvt.s32.f32 %v305
    %v308 = vcvt.s32.f32 %v300
    %v309 = vcvt.s32.f32 %v301
    %v310 = vmul.f32 %v308, %v267
    %v311 = vmul.f32 %v309, %v269
    %v312 = vmul.f32 %v306, 9.536743e-07
    %v313 = vmul.f32 %v307, 9.536743e-07
    %vm314 = vcmp.lt.f32.partialorder %v312, %v310
    %vm315 = vcmp.lt.f32.partialorder %v313, %v311
    %v316 = vsel %vm314, 1, 0
    %v317 = vsel %vm315, 1, 0
    %v318 = vadd.s32 %v296, %v316
    %v319 = vadd.s32 %v297, %v317
    %320 = vst [vmem:[#allocation10] sm:$0xff] %v318
    %321 = vst [vmem:[#allocation10 + $0x8] sm:$0xff] %v319
    // Predicated region
    $region34: #{tpu_custom_call.1} parent=1 // pred_check
      _
    $region35: #{tpu_custom_call.1} parent=1 // pred_check_branch
      %323 = sbr.rel (0) target = $region37
    $region36: #{tpu_custom_call.1} parent=1 // pred_region
      %s325 = ssub.s32 256, 256
      %326 = vsyncadd [#allocation4], %s325
      %s328 = sshll.u32 [#allocation10], 4
      %s329 = int_to_ptr.vmem [resolvable:$true] %s328
      %331 = dma.vmem_to_hbm [thread:$0]  %s329, 256, %s4, [#allocation4]
    $region37: #{tpu_custom_call.1} parent=1 // pred_fallthru
      _
    // Predicated region
    $region38: #{tpu_custom_call.1} parent=1 // pred_check
      _
    $region39: #{tpu_custom_call.1} parent=1 // pred_check_branch
      %333 = sbr.rel (0) target = $region41
    $region40: #{tpu_custom_call.1} parent=1 // pred_region
      %334 = dma.done [#allocation4], 256
    $region41: #{tpu_custom_call.1} parent=1 // pred_fallthru
      _
    %335 = vsyncpa [#allocation3], 1
    %336 = vsyncpa [#allocation6], 1
    %337 = vsyncpa [#allocation9], 1
    %338 = vsyncpa [#allocation4], 1

</llo_original>
